<compile_context>
chip_gen: v7x
topology: tpu7x:2x2x1
jax: 0.10.0
libtpu: 0.0.40
codegen_flags: <defaults>
</compile_context>

<pallas_src>
import jax
import jax.numpy as jnp
from jax.experimental import pallas as pl
from jax.experimental.pallas import tpu as pltpu

TILE_B = 512  # lanes per grid step; multiple of 128, comfortably fits VMEM


def _mlp_kernel(xT_ref, w1_ref, b1_ref, w2_ref, b2_ref, w3_ref, b3_ref, o_ref):
    # xT_ref: [12, TILE_B]   (batch on lanes)
    # w*:     [out, in] (PyTorch layout), b*: [out, 1]
    xT = xT_ref[...]

    h1 = jnp.dot(w1_ref[...], xT, preferred_element_type=jnp.float32) + b1_ref[...]
    h1 = jnp.maximum(h1, 0.0)                       # act1 = ReLU, [h1, TILE_B]

    h2 = jnp.dot(w2_ref[...], h1, preferred_element_type=jnp.float32) + b2_ref[...]
    h2 = jnp.maximum(h2, 0.0)                       # act2 = ReLU, [h2, TILE_B]

    out = jnp.dot(w3_ref[...], h2, preferred_element_type=jnp.float32) + b3_ref[...]
    o_ref[...] = out.astype(o_ref.dtype)            # [1, TILE_B] lane-dense store


def housing_model_forward(x, w1, b1, w2, b2, w3, b3):
    """x: [B, 12] f32. w*: [out, in]; b*: [out, 1]. Returns [B, 1] f32."""
    x = x.astype(jnp.float32)
    B, F = x.shape
    num_tiles = pl.cdiv(B, TILE_B)
    B_pad = num_tiles * TILE_B

    # Pad the batch, then flip to feature-major so batch sits on the lane axis.
    x_pad = jnp.pad(x, ((0, B_pad - B), (0, 0)))
    xT = x_pad.T  # [12, B_pad]

    const2d = lambda i: (0, 0)  # weights/biases: one block, resident across grid

    out_T = pl.pallas_call(
        _mlp_kernel,
        out_shape=jax.ShapeDtypeStruct((1, B_pad), jnp.float32),
        grid=(num_tiles,),
        in_specs=[
            pl.BlockSpec((F, TILE_B), lambda i: (0, i)),        # x tile (double-buffered)
            pl.BlockSpec(w1.shape, const2d),
            pl.BlockSpec(b1.shape, const2d),
            pl.BlockSpec(w2.shape, const2d),
            pl.BlockSpec(b2.shape, const2d),
            pl.BlockSpec(w3.shape, const2d),
            pl.BlockSpec(b3.shape, const2d),
        ],
        out_specs=pl.BlockSpec((1, TILE_B), lambda i: (0, i)),  # lane-dense output
        compiler_params=pltpu.CompilerParams(
            dimension_semantics=("parallel",),
        ),
    )(xT, w1, b1, w2, b2, w3, b3)

    # [1, B_pad] -> [B, 1]
    return out_T[:, :B].T


def init_params(key, in_features=12, h1=32, h2=16):
    """Deterministic PyTorch-like (uniform +/- 1/sqrt(fan_in)) init.
    Weights in PyTorch layout [out, in]; biases as [out, 1]."""
    ks = jax.random.split(key, 6)

    def linear(kw, kb, fan_in, fan_out):
        bound = 1.0 / jnp.sqrt(jnp.float32(fan_in))
        w = jax.random.uniform(kw, (fan_out, fan_in), jnp.float32, -bound, bound)
        b = jax.random.uniform(kb, (fan_out, 1), jnp.float32, -bound, bound)
        return w, b

    w1, b1 = linear(ks[0], ks[1], in_features, h1)
    w2, b2 = linear(ks[2], ks[3], h1, h2)
    w3, b3 = linear(ks[4], ks[5], h2, 1)
    return w1, b1, w2, b2, w3, b3


if __name__ == "__main__":
    key = jax.random.PRNGKey(0)
    k_x, k_p = jax.random.split(key)

    batch = 8
    x = jax.random.normal(k_x, (batch, 12), jnp.float32)
    params = init_params(k_p, in_features=12, h1=32, h2=16)

    out = housing_model_forward(x, *params)
    out = jax.block_until_ready(out)

    # Pure-JAX reference of the same math (PyTorch convention: x @ W.T + b).
    w1, b1, w2, b2, w3, b3 = params
    ref = jnp.maximum(x @ w1.T + b1.T, 0.0)
    ref = jnp.maximum(ref @ w2.T + b2.T, 0.0)
    ref = ref @ w3.T + b3.T

    assert out.shape == (batch, 1), out.shape
    assert jnp.allclose(out, ref, atol=1e-5, rtol=1e-5), (out, ref)

    print("KERNEL_OK")
</pallas_src>

<mosaic_0001>
module attributes {stable_mosaic.version = 11 : i64} {
  func.func @_mlp_kernel(%arg0: i32, %arg1: memref<12x512xf32, #tpu.memory_space<vmem>>, %arg2: memref<32x12xf32, #tpu.memory_space<vmem>>, %arg3: memref<32x1xf32, #tpu.memory_space<vmem>>, %arg4: memref<16x32xf32, #tpu.memory_space<vmem>>, %arg5: memref<16x1xf32, #tpu.memory_space<vmem>>, %arg6: memref<1x16xf32, #tpu.memory_space<vmem>>, %arg7: memref<1x1xf32, #tpu.memory_space<vmem>>, %arg8: memref<1x512xf32, #tpu.memory_space<vmem>>) attributes {dimension_semantics = [#tpu.dimension_semantics<parallel>], iteration_bounds = array<i64: 1>, scalar_prefetch = 0 : i64, scratch_operands = 0 : i64, tpu.core_type = #tpu.core_type<tc>, window_params = [{transform_indices = @transform_0, window_bounds = array<i64: 12, 512>}, {pipeline_mode = #tpu.pipeline_mode<synchronous>, transform_indices = @transform_1, window_bounds = array<i64: 32, 12>}, {pipeline_mode = #tpu.pipeline_mode<synchronous>, transform_indices = @transform_2, window_bounds = array<i64: 32, 1>}, {pipeline_mode = #tpu.pipeline_mode<synchronous>, transform_indices = @transform_3, window_bounds = array<i64: 16, 32>}, {pipeline_mode = #tpu.pipeline_mode<synchronous>, transform_indices = @transform_4, window_bounds = array<i64: 16, 1>}, {pipeline_mode = #tpu.pipeline_mode<synchronous>, transform_indices = @transform_5, window_bounds = array<i64: 1, 16>}, {pipeline_mode = #tpu.pipeline_mode<synchronous>, transform_indices = @transform_6, window_bounds = array<i64: 1, 1>}, {transform_indices = @transform_7, window_bounds = array<i64: 1, 512>}]} {
    %c0 = arith.constant 0 : index
    %c0_0 = arith.constant 0 : index
    %0 = vector.load %arg1[%c0, %c0_0] : memref<12x512xf32, #tpu.memory_space<vmem>>, vector<12x512xf32>
    %c0_1 = arith.constant 0 : index
    %c0_2 = arith.constant 0 : index
    %1 = vector.load %arg2[%c0_1, %c0_2] : memref<32x12xf32, #tpu.memory_space<vmem>>, vector<32x12xf32>
    %cst = arith.constant dense<0.000000e+00> : vector<32x512xf32>
    %2 = tpu.matmul %1, %0, %cst {dimension_numbers = #tpu.dot_dimension_numbers<[1], [0], [0], [1], [0, 0, 1, 1], [], []>} : vector<32x12xf32>, vector<12x512xf32>, vector<32x512xf32> -> vector<32x512xf32>
    %c0_3 = arith.constant 0 : index
    %c0_4 = arith.constant 0 : index
    %3 = vector.load %arg3[%c0_3, %c0_4] : memref<32x1xf32, #tpu.memory_space<vmem>>, vector<32x1xf32>
    %4 = vector.broadcast %3 : vector<32x1xf32> to vector<32x512xf32>
    %5 = arith.addf %2, %4 : vector<32x512xf32>
    %cst_5 = arith.constant 0.000000e+00 : f32
    %6 = vector.broadcast %cst_5 : f32 to vector<32x512xf32>
    %7 = arith.maximumf %5, %6 : vector<32x512xf32>
    %c0_6 = arith.constant 0 : index
    %c0_7 = arith.constant 0 : index
    %8 = vector.load %arg4[%c0_6, %c0_7] : memref<16x32xf32, #tpu.memory_space<vmem>>, vector<16x32xf32>
    %cst_8 = arith.constant dense<0.000000e+00> : vector<16x512xf32>
    %9 = tpu.matmul %8, %7, %cst_8 {dimension_numbers = #tpu.dot_dimension_numbers<[1], [0], [0], [1], [0, 0, 1, 1], [], []>} : vector<16x32xf32>, vector<32x512xf32>, vector<16x512xf32> -> vector<16x512xf32>
    %c0_9 = arith.constant 0 : index
    %c0_10 = arith.constant 0 : index
    %10 = vector.load %arg5[%c0_9, %c0_10] : memref<16x1xf32, #tpu.memory_space<vmem>>, vector<16x1xf32>
    %11 = vector.broadcast %10 : vector<16x1xf32> to vector<16x512xf32>
    %12 = arith.addf %9, %11 : vector<16x512xf32>
    %cst_11 = arith.constant 0.000000e+00 : f32
    %13 = vector.broadcast %cst_11 : f32 to vector<16x512xf32>
    %14 = arith.maximumf %12, %13 : vector<16x512xf32>
    %c0_12 = arith.constant 0 : index
    %c0_13 = arith.constant 0 : index
    %15 = vector.load %arg6[%c0_12, %c0_13] : memref<1x16xf32, #tpu.memory_space<vmem>>, vector<1x16xf32>
    %cst_14 = arith.constant dense<0.000000e+00> : vector<1x512xf32>
    %16 = tpu.matmul %15, %14, %cst_14 {dimension_numbers = #tpu.dot_dimension_numbers<[1], [0], [0], [1], [0, 0, 1, 1], [], []>} : vector<1x16xf32>, vector<16x512xf32>, vector<1x512xf32> -> vector<1x512xf32>
    %c0_15 = arith.constant 0 : index
    %c0_16 = arith.constant 0 : index
    %17 = vector.load %arg7[%c0_15, %c0_16] : memref<1x1xf32, #tpu.memory_space<vmem>>, vector<1x1xf32>
    %18 = vector.broadcast %17 : vector<1x1xf32> to vector<1x512xf32>
    %19 = arith.addf %16, %18 : vector<1x512xf32>
    %c0_17 = arith.constant 0 : index
    %c0_18 = arith.constant 0 : index
    %20 = vector.load %arg8[%c0_17, %c0_18] : memref<1x512xf32, #tpu.memory_space<vmem>>, vector<1x512xf32>
    tpu.vector_store %arg8[%c0_17, %c0_18], %19 {strides = array<i32>} : memref<1x512xf32, #tpu.memory_space<vmem>>, vector<1x512xf32>,
    return
  }
  func.func @transform_0(%arg0: i32) -> (i32, i32) {
    %c0_i32 = arith.constant 0 : i32
    %c0_i32_0 = arith.constant 0 : i32
    return %c0_i32, %arg0 : i32, i32
  }
  func.func @transform_1(%arg0: i32) -> (i32, i32) {
    %c0_i32 = arith.constant 0 : i32
    %c0_i32_0 = arith.constant 0 : i32
    %c0_i32_1 = arith.constant 0 : i32
    return %c0_i32, %c0_i32_0 : i32, i32
  }
  func.func @transform_2(%arg0: i32) -> (i32, i32) {
    %c0_i32 = arith.constant 0 : i32
    %c0_i32_0 = arith.constant 0 : i32
    %c0_i32_1 = arith.constant 0 : i32
    return %c0_i32, %c0_i32_0 : i32, i32
  }
  func.func @transform_3(%arg0: i32) -> (i32, i32) {
    %c0_i32 = arith.constant 0 : i32
    %c0_i32_0 = arith.constant 0 : i32
    %c0_i32_1 = arith.constant 0 : i32
    return %c0_i32, %c0_i32_0 : i32, i32
  }
  func.func @transform_4(%arg0: i32) -> (i32, i32) {
    %c0_i32 = arith.constant 0 : i32
    %c0_i32_0 = arith.constant 0 : i32
    %c0_i32_1 = arith.constant 0 : i32
    return %c0_i32, %c0_i32_0 : i32, i32
  }
  func.func @transform_5(%arg0: i32) -> (i32, i32) {
    %c0_i32 = arith.constant 0 : i32
    %c0_i32_0 = arith.constant 0 : i32
    %c0_i32_1 = arith.constant 0 : i32
    return %c0_i32, %c0_i32_0 : i32, i32
  }
  func.func @transform_6(%arg0: i32) -> (i32, i32) {
    %c0_i32 = arith.constant 0 : i32
    %c0_i32_0 = arith.constant 0 : i32
    %c0_i32_1 = arith.constant 0 : i32
    return %c0_i32, %c0_i32_0 : i32, i32
  }
  func.func @transform_7(%arg0: i32) -> (i32, i32) {
    %c0_i32 = arith.constant 0 : i32
    %c0_i32_0 = arith.constant 0 : i32
    return %c0_i32, %arg0 : i32, i32
  }
}

</mosaic_0001>

<llo_original>
// kernel: tpu_custom_call.1
$region0: #{tpu_custom_call.1}
  #allocation0 [shape = 'u32[]', space=smem, size = 0x4, offset = 0x4, fixed_abs, tag = 'smem constant byte address 0x4 - core index']
  #allocation1 [shape = 'u32[144,128]{1,0:T(1,128)}', space=vmem, size = 0x12000, scoped, tag = 'internal scratch']
  #allocation2 [shape = 'f32[1,1]{1,0:T(1,128)S(1)}', space=vmem, size = 0x200, scoped, tag = 'scoped memory for tpu_custom_call.1']
  %s0 = inlined_call_operand.vmem [shape: f32[12,512], index: 0, kind: input, shape index: {}]
  %s1 = inlined_call_operand.vmem [shape: f32[32,12], index: 1, kind: input, shape index: {}]
  %s2 = inlined_call_operand.vmem [shape: f32[32,1], index: 2, kind: input, shape index: {}]
  %s3 = inlined_call_operand.vmem [shape: f32[16,32], index: 3, kind: input, shape index: {}]
  %s4 = inlined_call_operand.vmem [shape: f32[16,1], index: 4, kind: input, shape index: {}]
  %s5 = inlined_call_operand.vmem [shape: f32[1,16], index: 5, kind: input, shape index: {}]
  %s6 = inlined_call_operand.<no memory space> [shape: f32[1,1], index: 6, kind: input, shape index: {}]
  %s7 = inlined_call_operand.hbm [shape: f32[1,512], index: 7, kind: output, shape index: {}]
  %s8 = sld [smem:[#allocation0]]
  $region38: #{tpu_custom_call.1} parent=0
    _
  %s10 = ssub.s32 1, %s8
  %s11 = scalar_select 0, %s10, %s8
  %v12 = vstv %s6
  %13 = vst [vmem:[#allocation2] sm:$0x1] %v12
  $region1: #{tpu_custom_call.1} parent=0
    #allocation3 [shape = 'u8[2048]{0}', space=vmem, size = 0x800, scoped, tag = 'output window, operand 0, single buffered']
    #allocation4 [shape = 's32[1]{0}', space=sflag, size = 0x4, scoped, tag = 'scoped memory for tpu_custom_call.1']
    %14 = vsyncpa [#allocation4], 0
    // Predicated region
    $region2: #{tpu_custom_call.1} parent=1 // pred_check
      _
    $region3: #{tpu_custom_call.1} parent=1 // pred_check_branch
      %16 = sbr.rel (0) target = $region5
    $region4: #{tpu_custom_call.1} parent=1 // pred_region
      _
    $region5: #{tpu_custom_call.1} parent=1 // pred_fallthru
      _
    // Predicated region
    $region6: #{tpu_custom_call.1} parent=1 // pred_check
      _
    $region7: #{tpu_custom_call.1} parent=1 // pred_check_branch
      %18 = sbr.rel (0) target = $region9
    $region8: #{tpu_custom_call.1} parent=1 // pred_region
      _
    $region9: #{tpu_custom_call.1} parent=1 // pred_fallthru
      _
    // Predicated region
    $region10: #{tpu_custom_call.1} parent=1 // pred_check
      _
    $region11: #{tpu_custom_call.1} parent=1 // pred_check_branch
      %20 = sbr.rel (0) target = $region13
    $region12: #{tpu_custom_call.1} parent=1 // pred_region
      _
    $region13: #{tpu_custom_call.1} parent=1 // pred_fallthru
      _
    // Predicated region
    $region14: #{tpu_custom_call.1} parent=1 // pred_check
      _
    $region15: #{tpu_custom_call.1} parent=1 // pred_check_branch
      %22 = sbr.rel (0) target = $region17
    $region16: #{tpu_custom_call.1} parent=1 // pred_region
      _
    $region17: #{tpu_custom_call.1} parent=1 // pred_fallthru
      _
    // Predicated region
    $region18: #{tpu_custom_call.1} parent=1 // pred_check
      _
    $region19: #{tpu_custom_call.1} parent=1 // pred_check_branch
      %24 = sbr.rel (0) target = $region21
    $region20: #{tpu_custom_call.1} parent=1 // pred_region
      _
    $region21: #{tpu_custom_call.1} parent=1 // pred_fallthru
      _
    // Predicated region
    $region22: #{tpu_custom_call.1} parent=1 // pred_check
      _
    $region23: #{tpu_custom_call.1} parent=1 // pred_check_branch
      %26 = sbr.rel (0) target = $region25
    $region24: #{tpu_custom_call.1} parent=1 // pred_region
      _
    $region25: #{tpu_custom_call.1} parent=1 // pred_fallthru
      _
    // Predicated region
    $region26: #{tpu_custom_call.1} parent=1 // pred_check
      _
    $region27: #{tpu_custom_call.1} parent=1 // pred_check_branch
      %28 = sbr.rel (0) target = $region29
    $region28: #{tpu_custom_call.1} parent=1 // pred_region
      _
    $region29: #{tpu_custom_call.1} parent=1 // pred_fallthru
      _
    %v29 = vld [vmem:[%s0] sm:$0xff]
    %v30 = vld [vmem:[%s0 + $0x8] sm:$0xff]
    %v31 = vld [vmem:[%s0 + $0x10] sm:$0xff]
    %v32 = vld [vmem:[%s0 + $0x18] sm:$0xff]
    %v33 = vld [vmem:[%s0 + $0x20] sm:$0xf]
    %v34 = vld [vmem:[%s0 + $0x28] sm:$0xf]
    %v35 = vld [vmem:[%s0 + $0x30] sm:$0xf]
    %v36 = vld [vmem:[%s0 + $0x38] sm:$0xf]
    %v37 = vld [vmem:[%s1] sm:$0xff]
    %v38 = vld [vmem:[%s1 + $0x8] sm:$0xff]
    %v39 = vld [vmem:[%s1 + $0x10] sm:$0xff]
    %v40 = vld [vmem:[%s1 + $0x18] sm:$0xff]
    %v41 = vld [vmem:[%s2] sm:$0xff]
    %v42 = vld [vmem:[%s2 + $0x8] sm:$0xff]
    %v43 = vld [vmem:[%s2 + $0x10] sm:$0xff]
    %v44 = vld [vmem:[%s2 + $0x18] sm:$0xff]
    %46 = vset.pattern.permute.xlu0 0
    %47 = vperm.xlu0 %46, %v41
    %v48 = vpop.permute.xlu0 %47
    %51 = vset.pattern.permute.xlu0 0
    %52 = vperm.xlu0 %51, %v42
    %v53 = vpop.permute.xlu0 %52
    %56 = vset.pattern.permute.xlu0 0
    %57 = vperm.xlu0 %56, %v43
    %v58 = vpop.permute.xlu0 %57
    %61 = vset.pattern.permute.xlu0 0
    %62 = vperm.xlu0 %61, %v44
    %v63 = vpop.permute.xlu0 %62
    %vm65 = vcmask 97280
    %v67 = vsel %vm65, %v37, 0
    %v70 = vsel %vm65, %v38, 0
    %v73 = vsel %vm65, %v39, 0
    %v76 = vsel %vm65, %v40, 0
    %vm78 = vcmask 1043456
    %v80 = vsel %vm78, %v33, 0
    %v83 = vsel %vm78, %v34, 0
    %v86 = vsel %vm78, %v35, 0
    %v89 = vsel %vm78, %v36, 0
    %91 = vmatprep.subr.mxu0 %v30
    %92 = vmatpush1.msra.mxu0 %v29
    %93 = vmatprep.subr.mxu0 %v83
    %94 = vmatpush1.msra.mxu0 %v80
    %95 = vmatprep.subr.mxu0 0.0
    %96 = vmatpush1.msra.mxu0 0.0
    %97 = vmatprep.subr.mxu0 0.0
    %98 = vmatpush1.msra.mxu0 0.0
    %99 = vmatprep.subr.mxu0 0.0
    %100 = vmatpush1.msra.mxu0 0.0
    %101 = vmatprep.subr.mxu0 0.0
    %102 = vmatpush1.msra.mxu0 0.0
    %103 = vmatprep.subr.mxu0 0.0
    %104 = vmatpush1.msra.mxu0 0.0
    %105 = vmatprep.subr.mxu0 0.0
    %106 = vmatpush1.msra.mxu0 0.0
    %107 = vmatprep.subr.mxu0 0.0
    %108 = vmatpush1.msra.mxu0 0.0
    %109 = vmatprep.subr.mxu0 0.0
    %110 = vmatpush1.msra.mxu0 0.0
    %111 = vmatprep.subr.mxu0 0.0
    %112 = vmatpush1.msra.mxu0 0.0
    %113 = vmatprep.subr.mxu0 0.0
    %114 = vmatpush1.msra.mxu0 0.0
    %115 = vmatprep.subr.mxu0 0.0
    %116 = vmatpush1.msra.mxu0 0.0
    %117 = vmatprep.subr.mxu0 0.0
    %118 = vmatpush1.msra.mxu0 0.0
    %119 = vmatprep.subr.mxu0 0.0
    %120 = vmatpush1.msra.mxu0 0.0
    %121 = vmatprep.subr.mxu0 0.0
    %122 = vmatpush1.msra.mxu0 0.0
    %123 = vmatprep.subr.mxu0 0.0
    %124 = vmatpush1.msra.mxu0 0.0
    %125 = vmatprep.subr.mxu0 0.0
    %126 = vmatpush1.msra.mxu0 0.0
    %127 = vmatprep.subr.mxu0 0.0
    %128 = vmatpush1.msra.mxu0 0.0
    %129 = vmatprep.subr.mxu0 0.0
    %130 = vmatpush1.msra.mxu0 0.0
    %131 = vmatprep.subr.mxu0 0.0
    %132 = vmatpush1.msra.mxu0 0.0
    %133 = vmatprep.subr.mxu0 0.0
    %134 = vmatpush1.msra.mxu0 0.0
    %135 = vmatprep.subr.mxu0 0.0
    %136 = vmatpush1.msra.mxu0 0.0
    %137 = vmatprep.subr.mxu0 0.0
    %138 = vmatpush1.msra.mxu0 0.0
    %139 = vmatprep.subr.mxu0 0.0
    %140 = vmatpush1.msra.mxu0 0.0
    %141 = vmatprep.subr.mxu0 0.0
    %142 = vmatpush1.msra.mxu0 0.0
    %143 = vmatprep.subr.mxu0 0.0
    %144 = vmatpush1.msra.mxu0 0.0
    %145 = vmatprep.subr.mxu0 0.0
    %146 = vmatpush1.msra.mxu0 0.0
    %147 = vmatprep.subr.mxu0 0.0
    %148 = vmatpush1.msra.mxu0 0.0
    %149 = vmatprep.subr.mxu0 0.0
    %150 = vmatpush1.msra.mxu0 0.0
    %151 = vmatprep.subr.mxu0 0.0
    %152 = vmatpush1.msra.mxu0 0.0
    %153 = vmatprep.subr.mxu0 0.0
    %154 = vmatpush1.msra.mxu0 0.0
    %155 = vmatprep.mubr.f32.mxu0 0.0
    %156 = vmatmul.mubr.f32.gmra.mrb[0].mxu0 %v67
    %v157 = vpop.f32.mrb[0].mxu0
    %v158 = vadd.f32 %v48, %v157
    %v159 = vpop.f32.mrb[0].mxu0
    %v160 = vadd.f32 %v48, %v159
    %161 = vmatprep.mubr.f32.mxu0 0.0
    %162 = vmatmul.mubr.f32.gmra.mrb[0].mxu0 %v70
    %v163 = vpop.f32.mrb[0].mxu0
    %v164 = vadd.f32 %v53, %v163
    %v165 = vpop.f32.mrb[0].mxu0
    %v166 = vadd.f32 %v53, %v165
    %167 = vmatprep.mubr.f32.mxu0 0.0
    %168 = vmatmul.mubr.f32.gmra.mrb[0].mxu0 %v73
    %v169 = vpop.f32.mrb[0].mxu0
    %v170 = vadd.f32 %v58, %v169
    %v171 = vpop.f32.mrb[0].mxu0
    %v172 = vadd.f32 %v58, %v171
    %173 = vmatprep.mubr.f32.mxu0 0.0
    %174 = vmatmul.mubr.f32.gmra.mrb[0].mxu0 %v76
    %v175 = vpop.f32.mrb[0].mxu0
    %v176 = vadd.f32 %v63, %v175
    %v177 = vpop.f32.mrb[0].mxu0
    %v178 = vadd.f32 %v63, %v177
    %179 = vdwg.mxu0
    %180 = vmatprep.subr.mxu0 %v32
    %181 = vmatpush1.msra.mxu0 %v31
    %182 = vmatprep.subr.mxu0 %v89
    %183 = vmatpush1.msra.mxu0 %v86
    %184 = vmatprep.subr.mxu0 0.0
    %185 = vmatpush1.msra.mxu0 0.0
    %186 = vmatprep.subr.mxu0 0.0
    %187 = vmatpush1.msra.mxu0 0.0
    %188 = vmatprep.subr.mxu0 0.0
    %189 = vmatpush1.msra.mxu0 0.0
    %190 = vmatprep.subr.mxu0 0.0
    %191 = vmatpush1.msra.mxu0 0.0
    %192 = vmatprep.subr.mxu0 0.0
    %193 = vmatpush1.msra.mxu0 0.0
    %194 = vmatprep.subr.mxu0 0.0
    %195 = vmatpush1.msra.mxu0 0.0
    %196 = vmatprep.subr.mxu0 0.0
    %197 = vmatpush1.msra.mxu0 0.0
    %198 = vmatprep.subr.mxu0 0.0
    %199 = vmatpush1.msra.mxu0 0.0
    %200 = vmatprep.subr.mxu0 0.0
    %201 = vmatpush1.msra.mxu0 0.0
    %202 = vmatprep.subr.mxu0 0.0
    %203 = vmatpush1.msra.mxu0 0.0
    %204 = vmatprep.subr.mxu0 0.0
    %205 = vmatpush1.msra.mxu0 0.0
    %206 = vmatprep.subr.mxu0 0.0
    %207 = vmatpush1.msra.mxu0 0.0
    %208 = vmatprep.subr.mxu0 0.0
    %209 = vmatpush1.msra.mxu0 0.0
    %210 = vmatprep.subr.mxu0 0.0
    %211 = vmatpush1.msra.mxu0 0.0
    %212 = vmatprep.subr.mxu0 0.0
    %213 = vmatpush1.msra.mxu0 0.0
    %214 = vmatprep.subr.mxu0 0.0
    %215 = vmatpush1.msra.mxu0 0.0
    %216 = vmatprep.subr.mxu0 0.0
    %217 = vmatpush1.msra.mxu0 0.0
    %218 = vmatprep.subr.mxu0 0.0
    %219 = vmatpush1.msra.mxu0 0.0
    %220 = vmatprep.subr.mxu0 0.0
    %221 = vmatpush1.msra.mxu0 0.0
    %222 = vmatprep.subr.mxu0 0.0
    %223 = vmatpush1.msra.mxu0 0.0
    %224 = vmatprep.subr.mxu0 0.0
    %225 = vmatpush1.msra.mxu0 0.0
    %226 = vmatprep.subr.mxu0 0.0
    %227 = vmatpush1.msra.mxu0 0.0
    %228 = vmatprep.subr.mxu0 0.0
    %229 = vmatpush1.msra.mxu0 0.0
    %230 = vmatprep.subr.mxu0 0.0
    %231 = vmatpush1.msra.mxu0 0.0
    %232 = vmatprep.subr.mxu0 0.0
    %233 = vmatpush1.msra.mxu0 0.0
    %234 = vmatprep.subr.mxu0 0.0
    %235 = vmatpush1.msra.mxu0 0.0
    %236 = vmatprep.subr.mxu0 0.0
    %237 = vmatpush1.msra.mxu0 0.0
    %238 = vmatprep.subr.mxu0 0.0
    %239 = vmatpush1.msra.mxu0 0.0
    %240 = vmatprep.subr.mxu0 0.0
    %241 = vmatpush1.msra.mxu0 0.0
    %242 = vmatprep.subr.mxu0 0.0
    %243 = vmatpush1.msra.mxu0 0.0
    %244 = vmatprep.mubr.f32.mxu0 0.0
    %245 = vmatmul.mubr.f32.gmra.mrb[0].mxu0 %v67
    %v246 = vpop.f32.mrb[0].mxu0
    %v247 = vadd.f32 %v48, %v246
    %v248 = vpop.f32.mrb[0].mxu0
    %v249 = vadd.f32 %v48, %v248
    %250 = vmatprep.mubr.f32.mxu0 0.0
    %251 = vmatmul.mubr.f32.gmra.mrb[0].mxu0 %v70
    %v252 = vpop.f32.mrb[0].mxu0
    %v253 = vadd.f32 %v53, %v252
    %v254 = vpop.f32.mrb[0].mxu0
    %v255 = vadd.f32 %v53, %v254
    %256 = vmatprep.mubr.f32.mxu0 0.0
    %257 = vmatmul.mubr.f32.gmra.mrb[0].mxu0 %v73
    %v258 = vpop.f32.mrb[0].mxu0
    %v259 = vadd.f32 %v58, %v258
    %v260 = vpop.f32.mrb[0].mxu0
    %v261 = vadd.f32 %v58, %v260
    %262 = vmatprep.mubr.f32.mxu0 0.0
    %263 = vmatmul.mubr.f32.gmra.mrb[0].mxu0 %v76
    %v264 = vpop.f32.mrb[0].mxu0
    %v265 = vadd.f32 %v63, %v264
    %v266 = vpop.f32.mrb[0].mxu0
    %v267 = vadd.f32 %v63, %v266
    %268 = vdwg.mxu0
    %v269 = vmax.f32 %v158, 0.0
    %v270 = vmax.f32 %v160, 0.0
    %v271 = vmax.f32 %v247, 0.0
    %v272 = vmax.f32 %v249, 0.0
    %v273 = vmax.f32 %v164, 0.0
    %v274 = vmax.f32 %v166, 0.0
    %v275 = vmax.f32 %v253, 0.0
    %v276 = vmax.f32 %v255, 0.0
    %v277 = vmax.f32 %v170, 0.0
    %v278 = vmax.f32 %v172, 0.0
    %v279 = vmax.f32 %v259, 0.0
    %v280 = vmax.f32 %v261, 0.0
    %v281 = vmax.f32 %v176, 0.0
    %v282 = vmax.f32 %v178, 0.0
    %v283 = vmax.f32 %v265, 0.0
    %v284 = vmax.f32 %v267, 0.0
    %v285 = vld [vmem:[%s3] sm:$0xff]
    %v286 = vld [vmem:[%s3 + $0x8] sm:$0xff]
    %v287 = vld [vmem:[%s4] sm:$0xff]
    %v288 = vld [vmem:[%s4 + $0x8] sm:$0xff]
    %290 = vset.pattern.permute.xlu0 0
    %291 = vperm.xlu0 %290, %v287
    %v292 = vpop.permute.xlu0 %291
    %295 = vset.pattern.permute.xlu0 0
    %296 = vperm.xlu0 %295, %v288
    %v297 = vpop.permute.xlu0 %296
    %vm299 = vcmask 261120
    %v301 = vsel %vm299, %v285, 0
    %v304 = vsel %vm299, %v286, 0
    %306 = vmatprep.subr.mxu0 %v270
    %307 = vmatpush1.msra.mxu0 %v269
    %308 = vmatprep.subr.mxu0 %v274
    %309 = vmatpush1.msra.mxu0 %v273
    %310 = vmatprep.subr.mxu0 %v278
    %311 = vmatpush1.msra.mxu0 %v277
    %312 = vmatprep.subr.mxu0 %v282
    %313 = vmatpush1.msra.mxu0 %v281
    %314 = vmatprep.subr.mxu0 0.0
    %315 = vmatpush1.msra.mxu0 0.0
    %316 = vmatprep.subr.mxu0 0.0
    %317 = vmatpush1.msra.mxu0 0.0
    %318 = vmatprep.subr.mxu0 0.0
    %319 = vmatpush1.msra.mxu0 0.0
    %320 = vmatprep.subr.mxu0 0.0
    %321 = vmatpush1.msra.mxu0 0.0
    %322 = vmatprep.subr.mxu0 0.0
    %323 = vmatpush1.msra.mxu0 0.0
    %324 = vmatprep.subr.mxu0 0.0
    %325 = vmatpush1.msra.mxu0 0.0
    %326 = vmatprep.subr.mxu0 0.0
    %327 = vmatpush1.msra.mxu0 0.0
    %328 = vmatprep.subr.mxu0 0.0
    %329 = vmatpush1.msra.mxu0 0.0
    %330 = vmatprep.subr.mxu0 0.0
    %331 = vmatpush1.msra.mxu0 0.0
    %332 = vmatprep.subr.mxu0 0.0
    %333 = vmatpush1.msra.mxu0 0.0
    %334 = vmatprep.subr.mxu0 0.0
    %335 = vmatpush1.msra.mxu0 0.0
    %336 = vmatprep.subr.mxu0 0.0
    %337 = vmatpush1.msra.mxu0 0.0
    %338 = vmatprep.subr.mxu0 0.0
    %339 = vmatpush1.msra.mxu0 0.0
    %340 = vmatprep.subr.mxu0 0.0
    %341 = vmatpush1.msra.mxu0 0.0
    %342 = vmatprep.subr.mxu0 0.0
    %343 = vmatpush1.msra.mxu0 0.0
    %344 = vmatprep.subr.mxu0 0.0
    %345 = vmatpush1.msra.mxu0 0.0
    %346 = vmatprep.subr.mxu0 0.0
    %347 = vmatpush1.msra.mxu0 0.0
    %348 = vmatprep.subr.mxu0 0.0
    %349 = vmatpush1.msra.mxu0 0.0
    %350 = vmatprep.subr.mxu0 0.0
    %351 = vmatpush1.msra.mxu0 0.0
    %352 = vmatprep.subr.mxu0 0.0
    %353 = vmatpush1.msra.mxu0 0.0
    %354 = vmatprep.subr.mxu0 0.0
    %355 = vmatpush1.msra.mxu0 0.0
    %356 = vmatprep.subr.mxu0 0.0
    %357 = vmatpush1.msra.mxu0 0.0
    %358 = vmatprep.subr.mxu0 0.0
    %359 = vmatpush1.msra.mxu0 0.0
    %360 = vmatprep.subr.mxu0 0.0
    %361 = vmatpush1.msra.mxu0 0.0
    %362 = vmatprep.subr.mxu0 0.0
    %363 = vmatpush1.msra.mxu0 0.0
    %364 = vmatprep.subr.mxu0 0.0
    %365 = vmatpush1.msra.mxu0 0.0
    %366 = vmatprep.subr.mxu0 0.0
    %367 = vmatpush1.msra.mxu0 0.0
    %368 = vmatprep.subr.mxu0 0.0
    %369 = vmatpush1.msra.mxu0 0.0
    %370 = vmatprep.mubr.f32.mxu0 0.0
    %371 = vmatmul.mubr.f32.gmra.mrb[0].mxu0 %v301
    %v372 = vpop.f32.mrb[0].mxu0
    %v373 = vadd.f32 %v292, %v372
    %v374 = vpop.f32.mrb[0].mxu0
    %v375 = vadd.f32 %v292, %v374
    %376 = vmatprep.mubr.f32.mxu0 0.0
    %377 = vmatmul.mubr.f32.gmra.mrb[0].mxu0 %v304
    %v378 = vpop.f32.mrb[0].mxu0
    %v379 = vadd.f32 %v297, %v378
    %v380 = vpop.f32.mrb[0].mxu0
    %v381 = vadd.f32 %v297, %v380
    %382 = vdwg.mxu0
    %383 = vmatprep.subr.mxu0 %v272
    %384 = vmatpush1.msra.mxu0 %v271
    %385 = vmatprep.subr.mxu0 %v276
    %386 = vmatpush1.msra.mxu0 %v275
    %387 = vmatprep.subr.mxu0 %v280
    %388 = vmatpush1.msra.mxu0 %v279
    %389 = vmatprep.subr.mxu0 %v284
    %390 = vmatpush1.msra.mxu0 %v283
    %391 = vmatprep.subr.mxu0 0.0
    %392 = vmatpush1.msra.mxu0 0.0
    %393 = vmatprep.subr.mxu0 0.0
    %394 = vmatpush1.msra.mxu0 0.0
    %395 = vmatprep.subr.mxu0 0.0
    %396 = vmatpush1.msra.mxu0 0.0
    %397 = vmatprep.subr.mxu0 0.0
    %398 = vmatpush1.msra.mxu0 0.0
    %399 = vmatprep.subr.mxu0 0.0
    %400 = vmatpush1.msra.mxu0 0.0
    %401 = vmatprep.subr.mxu0 0.0
    %402 = vmatpush1.msra.mxu0 0.0
    %403 = vmatprep.subr.mxu0 0.0
    %404 = vmatpush1.msra.mxu0 0.0
    %405 = vmatprep.subr.mxu0 0.0
    %406 = vmatpush1.msra.mxu0 0.0
    %407 = vmatprep.subr.mxu0 0.0
    %408 = vmatpush1.msra.mxu0 0.0
    %409 = vmatprep.subr.mxu0 0.0
    %410 = vmatpush1.msra.mxu0 0.0
    %411 = vmatprep.subr.mxu0 0.0
    %412 = vmatpush1.msra.mxu0 0.0
    %413 = vmatprep.subr.mxu0 0.0
    %414 = vmatpush1.msra.mxu0 0.0
    %415 = vmatprep.subr.mxu0 0.0
    %416 = vmatpush1.msra.mxu0 0.0
    %417 = vmatprep.subr.mxu0 0.0
    %418 = vmatpush1.msra.mxu0 0.0
    %419 = vmatprep.subr.mxu0 0.0
    %420 = vmatpush1.msra.mxu0 0.0
    %421 = vmatprep.subr.mxu0 0.0
    %422 = vmatpush1.msra.mxu0 0.0
    %423 = vmatprep.subr.mxu0 0.0
    %424 = vmatpush1.msra.mxu0 0.0
    %425 = vmatprep.subr.mxu0 0.0
    %426 = vmatpush1.msra.mxu0 0.0
    %427 = vmatprep.subr.mxu0 0.0
    %428 = vmatpush1.msra.mxu0 0.0
    %429 = vmatprep.subr.mxu0 0.0
    %430 = vmatpush1.msra.mxu0 0.0
    %431 = vmatprep.subr.mxu0 0.0
    %432 = vmatpush1.msra.mxu0 0.0
    %433 = vmatprep.subr.mxu0 0.0
    %434 = vmatpush1.msra.mxu0 0.0
    %435 = vmatprep.subr.mxu0 0.0
    %436 = vmatpush1.msra.mxu0 0.0
    %437 = vmatprep.subr.mxu0 0.0
    %438 = vmatpush1.msra.mxu0 0.0
    %439 = vmatprep.subr.mxu0 0.0
    %440 = vmatpush1.msra.mxu0 0.0
    %441 = vmatprep.subr.mxu0 0.0
    %442 = vmatpush1.msra.mxu0 0.0
    %443 = vmatprep.subr.mxu0 0.0
    %444 = vmatpush1.msra.mxu0 0.0
    %445 = vmatprep.subr.mxu0 0.0
    %446 = vmatpush1.msra.mxu0 0.0
    %447 = vmatprep.mubr.f32.mxu0 0.0
    %448 = vmatmul.mubr.f32.gmra.mrb[0].mxu0 %v301
    %v449 = vpop.f32.mrb[0].mxu0
    %v450 = vadd.f32 %v292, %v449
    %v451 = vpop.f32.mrb[0].mxu0
    %v452 = vadd.f32 %v292, %v451
    %453 = vmatprep.mubr.f32.mxu0 0.0
    %454 = vmatmul.mubr.f32.gmra.mrb[0].mxu0 %v304
    %v455 = vpop.f32.mrb[0].mxu0
    %v456 = vadd.f32 %v297, %v455
    %v457 = vpop.f32.mrb[0].mxu0
    %v458 = vadd.f32 %v297, %v457
    %459 = vdwg.mxu0
    %v460 = vmax.f32 %v373, 0.0
    %v461 = vmax.f32 %v375, 0.0
    %v462 = vmax.f32 %v450, 0.0
    %v463 = vmax.f32 %v452, 0.0
    %v464 = vmax.f32 %v379, 0.0
    %v465 = vmax.f32 %v381, 0.0
    %v466 = vmax.f32 %v456, 0.0
    %v467 = vmax.f32 %v458, 0.0
    %v468 = vld [vmem:[%s5] sm:$0x1]
    %v469 = vld [vmem:[#allocation2] sm:$0x1]
    %471 = vset.pattern.permute.xlu0 0
    %472 = vperm.xlu0 %471, %v469
    %v473 = vpop.permute.xlu0 %472
    %v475 = vlaneseq
    %v476 = vshrl.u32 %v475, 7
    %v477 = vsub.s32 0, %v476
    %v478 = vrot.slane %v473, %v477
    %vm479 = vcmask 130048
    %v481 = vsel %vm479, %v468, 0
    %483 = vmatprep.subr.mxu0 %v461
    %484 = vmatpush1.msra.mxu0 %v460
    %485 = vmatprep.subr.mxu0 %v465
    %486 = vmatpush1.msra.mxu0 %v464
    %487 = vmatprep.subr.mxu0 0.0
    %488 = vmatpush1.msra.mxu0 0.0
    %489 = vmatprep.subr.mxu0 0.0
    %490 = vmatpush1.msra.mxu0 0.0
    %491 = vmatprep.subr.mxu0 0.0
    %492 = vmatpush1.msra.mxu0 0.0
    %493 = vmatprep.subr.mxu0 0.0
    %494 = vmatpush1.msra.mxu0 0.0
    %495 = vmatprep.subr.mxu0 0.0
    %496 = vmatpush1.msra.mxu0 0.0
    %497 = vmatprep.subr.mxu0 0.0
    %498 = vmatpush1.msra.mxu0 0.0
    %499 = vmatprep.subr.mxu0 0.0
    %500 = vmatpush1.msra.mxu0 0.0
    %501 = vmatprep.subr.mxu0 0.0
    %502 = vmatpush1.msra.mxu0 0.0
    %503 = vmatprep.subr.mxu0 0.0
    %504 = vmatpush1.msra.mxu0 0.0
    %505 = vmatprep.subr.mxu0 0.0
    %506 = vmatpush1.msra.mxu0 0.0
    %507 = vmatprep.subr.mxu0 0.0
    %508 = vmatpush1.msra.mxu0 0.0
    %509 = vmatprep.subr.mxu0 0.0
    %510 = vmatpush1.msra.mxu0 0.0
    %511 = vmatprep.subr.mxu0 0.0
    %512 = vmatpush1.msra.mxu0 0.0
    %513 = vmatprep.subr.mxu0 0.0
    %514 = vmatpush1.msra.mxu0 0.0
    %515 = vmatprep.subr.mxu0 0.0
    %516 = vmatpush1.msra.mxu0 0.0
    %517 = vmatprep.subr.mxu0 0.0
    %518 = vmatpush1.msra.mxu0 0.0
    %519 = vmatprep.subr.mxu0 0.0
    %520 = vmatpush1.msra.mxu0 0.0
    %521 = vmatprep.subr.mxu0 0.0
    %522 = vmatpush1.msra.mxu0 0.0
    %523 = vmatprep.subr.mxu0 0.0
    %524 = vmatpush1.msra.mxu0 0.0
    %525 = vmatprep.subr.mxu0 0.0
    %526 = vmatpush1.msra.mxu0 0.0
    %527 = vmatprep.subr.mxu0 0.0
    %528 = vmatpush1.msra.mxu0 0.0
    %529 = vmatprep.subr.mxu0 0.0
    %530 = vmatpush1.msra.mxu0 0.0
    %531 = vmatprep.subr.mxu0 0.0
    %532 = vmatpush1.msra.mxu0 0.0
    %533 = vmatprep.subr.mxu0 0.0
    %534 = vmatpush1.msra.mxu0 0.0
    %535 = vmatprep.subr.mxu0 0.0
    %536 = vmatpush1.msra.mxu0 0.0
    %537 = vmatprep.subr.mxu0 0.0
    %538 = vmatpush1.msra.mxu0 0.0
    %539 = vmatprep.subr.mxu0 0.0
    %540 = vmatpush1.msra.mxu0 0.0
    %541 = vmatprep.subr.mxu0 0.0
    %542 = vmatpush1.msra.mxu0 0.0
    %543 = vmatprep.subr.mxu0 0.0
    %544 = vmatpush1.msra.mxu0 0.0
    %545 = vmatprep.subr.mxu0 0.0
    %546 = vmatpush1.msra.mxu0 0.0
    %547 = vmatprep.mubr.f32.mxu0 0.0
    %548 = vmatmul.mubr.f32.gmra.mrb[0].mxu0 %v481
    %v549 = vpop.f32.mrb[0].mxu0
    %v550 = vadd.f32 %v478, %v549
    %v551 = vpop.f32.mrb[0].mxu0
    %v552 = vadd.f32 %v478, %v551
    %553 = vdwg.mxu0
    %554 = vmatprep.subr.mxu0 %v463
    %555 = vmatpush1.msra.mxu0 %v462
    %556 = vmatprep.subr.mxu0 %v467
    %557 = vmatpush1.msra.mxu0 %v466
    %558 = vmatprep.subr.mxu0 0.0
    %559 = vmatpush1.msra.mxu0 0.0
    %560 = vmatprep.subr.mxu0 0.0
    %561 = vmatpush1.msra.mxu0 0.0
    %562 = vmatprep.subr.mxu0 0.0
    %563 = vmatpush1.msra.mxu0 0.0
    %564 = vmatprep.subr.mxu0 0.0
    %565 = vmatpush1.msra.mxu0 0.0
    %566 = vmatprep.subr.mxu0 0.0
    %567 = vmatpush1.msra.mxu0 0.0
    %568 = vmatprep.subr.mxu0 0.0
    %569 = vmatpush1.msra.mxu0 0.0
    %570 = vmatprep.subr.mxu0 0.0
    %571 = vmatpush1.msra.mxu0 0.0
    %572 = vmatprep.subr.mxu0 0.0
    %573 = vmatpush1.msra.mxu0 0.0
    %574 = vmatprep.subr.mxu0 0.0
    %575 = vmatpush1.msra.mxu0 0.0
    %576 = vmatprep.subr.mxu0 0.0
    %577 = vmatpush1.msra.mxu0 0.0
    %578 = vmatprep.subr.mxu0 0.0
    %579 = vmatpush1.msra.mxu0 0.0
    %580 = vmatprep.subr.mxu0 0.0
    %581 = vmatpush1.msra.mxu0 0.0
    %582 = vmatprep.subr.mxu0 0.0
    %583 = vmatpush1.msra.mxu0 0.0
    %584 = vmatprep.subr.mxu0 0.0
    %585 = vmatpush1.msra.mxu0 0.0
    %586 = vmatprep.subr.mxu0 0.0
    %587 = vmatpush1.msra.mxu0 0.0
    %588 = vmatprep.subr.mxu0 0.0
    %589 = vmatpush1.msra.mxu0 0.0
    %590 = vmatprep.subr.mxu0 0.0
    %591 = vmatpush1.msra.mxu0 0.0
    %592 = vmatprep.subr.mxu0 0.0
    %593 = vmatpush1.msra.mxu0 0.0
    %594 = vmatprep.subr.mxu0 0.0
    %595 = vmatpush1.msra.mxu0 0.0
    %596 = vmatprep.subr.mxu0 0.0
    %597 = vmatpush1.msra.mxu0 0.0
    %598 = vmatprep.subr.mxu0 0.0
    %599 = vmatpush1.msra.mxu0 0.0
    %600 = vmatprep.subr.mxu0 0.0
    %601 = vmatpush1.msra.mxu0 0.0
    %602 = vmatprep.subr.mxu0 0.0
    %603 = vmatpush1.msra.mxu0 0.0
    %604 = vmatprep.subr.mxu0 0.0
    %605 = vmatpush1.msra.mxu0 0.0
    %606 = vmatprep.subr.mxu0 0.0
    %607 = vmatpush1.msra.mxu0 0.0
    %608 = vmatprep.subr.mxu0 0.0
    %609 = vmatpush1.msra.mxu0 0.0
    %610 = vmatprep.subr.mxu0 0.0
    %611 = vmatpush1.msra.mxu0 0.0
    %612 = vmatprep.subr.mxu0 0.0
    %613 = vmatpush1.msra.mxu0 0.0
    %614 = vmatprep.subr.mxu0 0.0
    %615 = vmatpush1.msra.mxu0 0.0
    %616 = vmatprep.subr.mxu0 0.0
    %617 = vmatpush1.msra.mxu0 0.0
    %618 = vmatprep.mubr.f32.mxu0 0.0
    %619 = vmatmul.mubr.f32.gmra.mrb[0].mxu0 %v481
    %v620 = vpop.f32.mrb[0].mxu0
    %v621 = vadd.f32 %v478, %v620
    %v622 = vpop.f32.mrb[0].mxu0
    %v623 = vadd.f32 %v478, %v622
    %624 = vdwg.mxu0
    %v629 = vcombine.low %v550, %v552
    %v630 = vcombine.low %v621, %v623
    %v632 = vunpack.c.l.s4 1966171168
    %v633 = vunpack.c.0.s8 %v632
    %v634 = vlaneseq
    %v635 = vshrl.u32 %v634, 7
    %v636 = vsub.s32 %v633, %v635
    %v637 = vrot.slane %v629, %v636
    %v639 = vunpack.c.l.s4 1966171168
    %v640 = vunpack.c.0.s8 %v639
    %v641 = vlaneseq
    %v642 = vshrl.u32 %v641, 7
    %v643 = vsub.s32 %v640, %v642
    %v644 = vrot.slane %v630, %v643
    %v645 = vcombine.low %v637, %v644
    %v647 = vunpack.c.l.s4 1966171168
    %v648 = vunpack.c.0.s8 %v647
    %v649 = vlaneseq
    %v650 = vshrl.u32 %v649, 7
    %v651 = vsub.s32 %v648, %v650
    %v652 = vrot.slane %v645, %v651
    %v654 = vlaneseq
    %vm655 = vcmp.ge.s32.totalorder %v654, 0
    %vm656 = vcmp.lt.s32.totalorder %v654, 512
    %vm657 = vmand %vm655, %vm656
    %658 = vst.msk [vmem:[#allocation3] sm:$0xf] %vm657, %v652
    // Predicated region
    $region30: #{tpu_custom_call.1} parent=1 // pred_check
      _
    $region31: #{tpu_custom_call.1} parent=1 // pred_check_branch
      %660 = sbr.rel (0) target = $region33
    $region32: #{tpu_custom_call.1} parent=1 // pred_region
      %s662 = ssub.s32 64, 64
      %663 = vsyncadd [#allocation4], %s662
      %s665 = sshll.u32 [#allocation3], 4
      %s666 = int_to_ptr.vmem [resolvable:$true] %s665
      %668 = dma.vmem_to_hbm [thread:$0]  %s666, 64, %s7, [#allocation4]
    $region33: #{tpu_custom_call.1} parent=1 // pred_fallthru
      _
    // Predicated region
    $region34: #{tpu_custom_call.1} parent=1 // pred_check
      _
    $region35: #{tpu_custom_call.1} parent=1 // pred_check_branch
      %670 = sbr.rel (0) target = $region37
    $region36: #{tpu_custom_call.1} parent=1 // pred_region
      %671 = dma.done [#allocation4], 64
    $region37: #{tpu_custom_call.1} parent=1 // pred_fallthru
      _
    %672 = vsyncpa [#allocation4], 1

</llo_original>
